<compile_context>
chip_gen: v5e
topology: v5e:2x2
jax: 0.10.0
libtpu: 0.0.40
codegen_flags: <defaults>
</compile_context>

<pallas_src>
import jax
import jax.numpy as jnp
from jax import lax
from jax.experimental import pallas as pl
from jax.experimental.pallas import tpu as pltpu  # noqa: F401  (TPU backend)

EPS = 1e-5


def bn_relu_kernel(x_ref, params_ref, o_ref, mean_ref, var_ref):
    # x_ref:      (R, C)  -- R = N*H*W rows on sublanes, channels on lanes.
    # params_ref: (2, C)  -- row 0 = gamma, row 1 = beta (lane-major).
    # o_ref:      (R, C)  -- normalized + ReLU output (lane-dense stores).
    # mean_ref:   (1, C)  -- batch mean per channel.
    # var_ref:    (1, C)  -- biased batch variance per channel.
    x = x_ref[...]                                   # (R, C) f32
    inv_n = 1.0 / x.shape[0]

    # Two-pass per-channel statistics (data is VMEM-resident, so the second
    # pass is free of HBM traffic and avoids E[x^2]-mean^2 cancellation).
    mean = jnp.sum(x, axis=0, keepdims=True) * inv_n          # (1, C)
    centered = x - mean                                       # (R, C)
    var = jnp.sum(centered * centered, axis=0, keepdims=True) * inv_n  # (1, C)
    inv_std = lax.rsqrt(var + EPS)                            # (1, C)

    gamma = params_ref[0:1, :]                                # (1, C)
    beta = params_ref[1:2, :]                                 # (1, C)

    scale = gamma * inv_std                                   # (1, C)
    y = centered * scale + beta                               # (R, C)

    o_ref[...] = jnp.maximum(y, 0.0).astype(o_ref.dtype)
    mean_ref[...] = mean
    var_ref[...] = var


def batchnorm_relu(x_nchw, gamma, beta):
    """Training-mode BatchNorm2d + ReLU.

    x_nchw: (N, C, H, W) f32.  Returns (y_nchw, batch_mean, batch_var) where
    batch_var is the biased variance (the caller can form the unbiased value
    for running_var updates).
    """
    N, C, H, W = x_nchw.shape
    R = N * H * W

    # Channels-last slab: rows = (n, h, w), lanes = channels (lane-dense).
    x2d = jnp.transpose(x_nchw, (0, 2, 3, 1)).reshape(R, C).astype(jnp.float32)
    params = jnp.stack(
        [gamma.astype(jnp.float32), beta.astype(jnp.float32)], axis=0
    )  # (2, C), one contiguous DMA

    y2d, mean, var = pl.pallas_call(
        bn_relu_kernel,
        out_shape=(
            jax.ShapeDtypeStruct((R, C), jnp.float32),
            jax.ShapeDtypeStruct((1, C), jnp.float32),
            jax.ShapeDtypeStruct((1, C), jnp.float32),
        ),
        in_specs=[
            pl.BlockSpec((R, C), lambda: (0, 0)),   # full lane-dense slab
            pl.BlockSpec((2, C), lambda: (0, 0)),   # gamma/beta, lane-major
        ],
        out_specs=[
            pl.BlockSpec((R, C), lambda: (0, 0)),
            pl.BlockSpec((1, C), lambda: (0, 0)),
            pl.BlockSpec((1, C), lambda: (0, 0)),
        ],
        input_output_aliases={0: 0},  # donate x slab to y slab (same shape/dtype)
    )(x2d, params)

    y = jnp.transpose(y2d.reshape(N, H, W, C), (0, 3, 1, 2))
    return y, mean[0], var[0]


if __name__ == "__main__":
    # Shapes implied by BatchNorm2d(1488) applied to x461 = (1, 1488, 7, 7).
    N, C, H, W = 1, 1488, 7, 7

    key = jax.random.PRNGKey(0)
    kx, kg, kb = jax.random.split(key, 3)
    x = jax.random.normal(kx, (N, C, H, W), dtype=jnp.float32)
    gamma = 1.0 + 0.1 * jax.random.normal(kg, (C,), dtype=jnp.float32)
    beta = 0.1 * jax.random.normal(kb, (C,), dtype=jnp.float32)

    out, batch_mean, batch_var = batchnorm_relu(x, gamma, beta)
    out = jax.block_until_ready(out)

    # Pure-JAX reference (training-mode BN + ReLU).
    mean_ref = jnp.mean(x, axis=(0, 2, 3), keepdims=True)
    var_ref = jnp.mean((x - mean_ref) ** 2, axis=(0, 2, 3), keepdims=True)
    ref = (x - mean_ref) * lax.rsqrt(var_ref + EPS) * gamma[None, :, None, None] \
          + beta[None, :, None, None]
    ref = jnp.maximum(ref, 0.0)

    assert out.shape == (N, C, H, W)
    assert jnp.max(jnp.abs(out - ref)) < 1e-4
    assert jnp.max(jnp.abs(batch_mean - mean_ref.reshape(C))) < 1e-4
    assert jnp.max(jnp.abs(batch_var - var_ref.reshape(C))) < 1e-4

    print("KERNEL_OK")
</pallas_src>

<mosaic_0001>
module attributes {stable_mosaic.version = 11 : i64} {
  func.func @bn_relu_kernel(%arg0: memref<49x1488xf32, #tpu.memory_space<vmem>>, %arg1: memref<2x1488xf32, #tpu.memory_space<vmem>>, %arg2: memref<49x1488xf32, #tpu.memory_space<vmem>>, %arg3: memref<1x1488xf32, #tpu.memory_space<vmem>>, %arg4: memref<1x1488xf32, #tpu.memory_space<vmem>>) attributes {dimension_semantics = [], scalar_prefetch = 0 : i64, scratch_operands = 0 : i64, tpu.core_type = #tpu.core_type<tc>} {
    %c0 = arith.constant 0 : index
    %c0_0 = arith.constant 0 : index
    %0 = vector.load %arg0[%c0, %c0_0] : memref<49x1488xf32, #tpu.memory_space<vmem>>, vector<49x1488xf32>
    %cst = arith.constant dense<0.000000e+00> : vector<1488xf32>
    %1 = vector.multi_reduction <add>, %0, %cst [0] : vector<49x1488xf32> to vector<1488xf32>
    %2 = vector.shape_cast %1 : vector<1488xf32> to vector<1x1488xf32>
    %cst_1 = arith.constant 0.0204081628 : f32
    %3 = vector.broadcast %cst_1 : f32 to vector<1x1488xf32>
    %4 = arith.mulf %2, %3 : vector<1x1488xf32>
    %5 = vector.broadcast %4 : vector<1x1488xf32> to vector<49x1488xf32>
    %6 = arith.subf %0, %5 : vector<49x1488xf32>
    %7 = arith.mulf %6, %6 : vector<49x1488xf32>
    %cst_2 = arith.constant dense<0.000000e+00> : vector<1488xf32>
    %8 = vector.multi_reduction <add>, %7, %cst_2 [0] : vector<49x1488xf32> to vector<1488xf32>
    %9 = vector.shape_cast %8 : vector<1488xf32> to vector<1x1488xf32>
    %cst_3 = arith.constant 0.0204081628 : f32
    %10 = vector.broadcast %cst_3 : f32 to vector<1x1488xf32>
    %11 = arith.mulf %9, %10 : vector<1x1488xf32>
    %cst_4 = arith.constant 9.99999974E-6 : f32
    %12 = vector.broadcast %cst_4 : f32 to vector<1x1488xf32>
    %13 = arith.addf %11, %12 : vector<1x1488xf32>
    %14 = math.rsqrt %13 : vector<1x1488xf32>
    %c0_5 = arith.constant 0 : index
    %c0_6 = arith.constant 0 : index
    %15 = vector.load %arg1[%c0_5, %c0_6] : memref<2x1488xf32, #tpu.memory_space<vmem>>, vector<1x1488xf32>
    %c1 = arith.constant 1 : index
    %c0_7 = arith.constant 0 : index
    %16 = vector.load %arg1[%c1, %c0_7] : memref<2x1488xf32, #tpu.memory_space<vmem>>, vector<1x1488xf32>
    %17 = arith.mulf %15, %14 : vector<1x1488xf32>
    %18 = vector.broadcast %17 : vector<1x1488xf32> to vector<49x1488xf32>
    %19 = arith.mulf %6, %18 : vector<49x1488xf32>
    %20 = vector.broadcast %16 : vector<1x1488xf32> to vector<49x1488xf32>
    %21 = arith.addf %19, %20 : vector<49x1488xf32>
    %cst_8 = arith.constant 0.000000e+00 : f32
    %22 = vector.broadcast %cst_8 : f32 to vector<49x1488xf32>
    %23 = arith.maximumf %21, %22 : vector<49x1488xf32>
    %c0_9 = arith.constant 0 : index
    %c0_10 = arith.constant 0 : index
    %24 = vector.load %arg2[%c0_9, %c0_10] : memref<49x1488xf32, #tpu.memory_space<vmem>>, vector<49x1488xf32>
    tpu.vector_store %arg2[%c0_9, %c0_10], %23 {strides = array<i32>} : memref<49x1488xf32, #tpu.memory_space<vmem>>, vector<49x1488xf32>,
    %c0_11 = arith.constant 0 : index
    %c0_12 = arith.constant 0 : index
    %25 = vector.load %arg3[%c0_11, %c0_12] : memref<1x1488xf32, #tpu.memory_space<vmem>>, vector<1x1488xf32>
    tpu.vector_store %arg3[%c0_11, %c0_12], %4 {strides = array<i32>} : memref<1x1488xf32, #tpu.memory_space<vmem>>, vector<1x1488xf32>,
    %c0_13 = arith.constant 0 : index
    %c0_14 = arith.constant 0 : index
    %26 = vector.load %arg4[%c0_13, %c0_14] : memref<1x1488xf32, #tpu.memory_space<vmem>>, vector<1x1488xf32>
    tpu.vector_store %arg4[%c0_13, %c0_14], %11 {strides = array<i32>} : memref<1x1488xf32, #tpu.memory_space<vmem>>, vector<1x1488xf32>,
    return
  }
}

</mosaic_0001>

<llo_original>
// kernel: tpu_custom_call.1
$region0: #{tpu_custom_call.1}
  #allocation0 [shape = 'u32[]', space=smem, size = 0x4, offset = 0x4, fixed_abs, tag = 'smem constant byte address 0x4 - core index']
  #allocation1 [shape = 'u32[72,128]{1,0:T(1,128)}', space=vmem, size = 0x9000, scoped, tag = 'internal scratch']
  %s0 = inlined_call_operand.hbm [shape: f32[49,1488], index: 0, kind: input, shape index: {}, may-alias: {0,2}]
  %s1 = inlined_call_operand.vmem [shape: f32[2,1488], index: 1, kind: input, shape index: {}]
  %s2 = inlined_call_operand.hbm [shape: f32[49,1488], index: 2, kind: output, shape index: {0}, may-alias: {0,2}]
  %s3 = inlined_call_operand.hbm [shape: f32[1,1488], index: 3, kind: output, shape index: {1}]
  %s4 = inlined_call_operand.hbm [shape: f32[1,1488], index: 4, kind: output, shape index: {2}]
  %5 = xla_tuple %s2, %s3, %s4
  %s6 = sld [smem:[#allocation0]]
  $region38: #{tpu_custom_call.1} parent=0
    _
  %s8 = ssub.s32 1, %s6
  %s9 = scalar_select 0, %s8, %s6
  $region1: #{tpu_custom_call.1} parent=0
    #allocation2 [shape = 'u8[344064]{0}', space=vmem, size = 0x54000, scoped, tag = 'input window, operand 0, single buffered']
    #allocation3 [shape = 's32[1]{0}', space=sflag, size = 0x4, scoped, tag = 'scoped memory for tpu_custom_call.1']
    #allocation4 [shape = 's32[1]{0}', space=sflag, size = 0x4, scoped, tag = 'scoped memory for tpu_custom_call.1']
    #allocation5 [shape = 'u8[344064]{0}', space=vmem, size = 0x54000, scoped, tag = 'output window, operand 0, single buffered']
    #allocation6 [shape = 'u8[6144]{0}', space=vmem, size = 0x1800, scoped, tag = 'output window, operand 1, single buffered']
    #allocation7 [shape = 's32[1]{0}', space=sflag, size = 0x4, scoped, tag = 'scoped memory for tpu_custom_call.1']
    #allocation8 [shape = 'u8[6144]{0}', space=vmem, size = 0x1800, scoped, tag = 'output window, operand 2, single buffered']
    %10 = vsyncpa [#allocation3], 0
    %11 = vsyncpa [#allocation4], 0
    %12 = vsyncpa [#allocation7], 0
    // Predicated region
    $region2: #{tpu_custom_call.1} parent=1 // pred_check
      _
    $region3: #{tpu_custom_call.1} parent=1 // pred_check_branch
      %14 = sbr.rel (0) target = $region5
    $region4: #{tpu_custom_call.1} parent=1 // pred_region
      %16 = vsyncadd [#allocation3], 0
      %s17 = sshll.u32 %s0, 4
      %s18 = int_to_ptr.hbm [resolvable:$true] %s17
      %s19 = sshll.u32 [#allocation2], 4
      %s20 = int_to_ptr.vmem [resolvable:$true] %s19
      %25 = dma.hbm_to_vmem [thread:$0]  %s18, 10752, %s20, [#allocation3], 1536, 1536, 96
    $region5: #{tpu_custom_call.1} parent=1 // pred_fallthru
      _
    // Predicated region
    $region6: #{tpu_custom_call.1} parent=1 // pred_check
      _
    $region7: #{tpu_custom_call.1} parent=1 // pred_check_branch
      %27 = sbr.rel (0) target = $region9
    $region8: #{tpu_custom_call.1} parent=1 // pred_region
      _
    $region9: #{tpu_custom_call.1} parent=1 // pred_fallthru
      _
    // Predicated region
    $region10: #{tpu_custom_call.1} parent=1 // pred_check
      _
    $region11: #{tpu_custom_call.1} parent=1 // pred_check_branch
      %29 = sbr.rel (0) target = $region13
    $region12: #{tpu_custom_call.1} parent=1 // pred_region
      %31 = dma.done [#allocation3], 10752
    $region13: #{tpu_custom_call.1} parent=1 // pred_fallthru
      _
    %v32 = vld [vmem:[#allocation2] sm:$0xff]
    %v33 = vld [vmem:[#allocation2 + $0x8] sm:$0xff]
    %v34 = vld [vmem:[#allocation2 + $0x10] sm:$0xff]
    %v35 = vld [vmem:[#allocation2 + $0x18] sm:$0xff]
    %v36 = vld [vmem:[#allocation2 + $0x20] sm:$0xff]
    %v37 = vld [vmem:[#allocation2 + $0x28] sm:$0xff]
    %v38 = vld [vmem:[#allocation2 + $0x30] sm:$0xff]
    %v39 = vld [vmem:[#allocation2 + $0x38] sm:$0xff]
    %v40 = vld [vmem:[#allocation2 + $0x40] sm:$0xff]
    %v41 = vld [vmem:[#allocation2 + $0x48] sm:$0xff]
    %v42 = vld [vmem:[#allocation2 + $0x50] sm:$0xff]
    %v43 = vld [vmem:[#allocation2 + $0x58] sm:$0xff]
    %v44 = vld [vmem:[#allocation2 + $0x60] sm:$0xff]
    %v45 = vld [vmem:[#allocation2 + $0x68] sm:$0xff]
    %v46 = vld [vmem:[#allocation2 + $0x70] sm:$0xff]
    %v47 = vld [vmem:[#allocation2 + $0x78] sm:$0xff]
    %v48 = vld [vmem:[#allocation2 + $0x80] sm:$0xff]
    %v49 = vld [vmem:[#allocation2 + $0x88] sm:$0xff]
    %v50 = vld [vmem:[#allocation2 + $0x90] sm:$0xff]
    %v51 = vld [vmem:[#allocation2 + $0x98] sm:$0xff]
    %v52 = vld [vmem:[#allocation2 + $0xa0] sm:$0xff]
    %v53 = vld [vmem:[#allocation2 + $0xa8] sm:$0xff]
    %v54 = vld [vmem:[#allocation2 + $0xb0] sm:$0xff]
    %v55 = vld [vmem:[#allocation2 + $0xb8] sm:$0xff]
    %v56 = vld [vmem:[#allocation2 + $0xc0] sm:$0xff]
    %v57 = vld [vmem:[#allocation2 + $0xc8] sm:$0xff]
    %v58 = vld [vmem:[#allocation2 + $0xd0] sm:$0xff]
    %v59 = vld [vmem:[#allocation2 + $0xd8] sm:$0xff]
    %v60 = vld [vmem:[#allocation2 + $0xe0] sm:$0xff]
    %v61 = vld [vmem:[#allocation2 + $0xe8] sm:$0xff]
    %v62 = vld [vmem:[#allocation2 + $0xf0] sm:$0xff]
    %v63 = vld [vmem:[#allocation2 + $0xf8] sm:$0xff]
    %v64 = vld [vmem:[#allocation2 + $0x100] sm:$0xff]
    %v65 = vld [vmem:[#allocation2 + $0x108] sm:$0xff]
    %v66 = vld [vmem:[#allocation2 + $0x110] sm:$0xff]
    %v67 = vld [vmem:[#allocation2 + $0x118] sm:$0xff]
    %v68 = vld [vmem:[#allocation2 + $0x120] sm:$0xff]
    %v69 = vld [vmem:[#allocation2 + $0x128] sm:$0xff]
    %v70 = vld [vmem:[#allocation2 + $0x130] sm:$0xff]
    %v71 = vld [vmem:[#allocation2 + $0x138] sm:$0xff]
    %v72 = vld [vmem:[#allocation2 + $0x140] sm:$0xff]
    %v73 = vld [vmem:[#allocation2 + $0x148] sm:$0xff]
    %v74 = vld [vmem:[#allocation2 + $0x150] sm:$0xff]
    %v75 = vld [vmem:[#allocation2 + $0x158] sm:$0xff]
    %v76 = vld [vmem:[#allocation2 + $0x160] sm:$0xff]
    %v77 = vld [vmem:[#allocation2 + $0x168] sm:$0xff]
    %v78 = vld [vmem:[#allocation2 + $0x170] sm:$0xff]
    %v79 = vld [vmem:[#allocation2 + $0x178] sm:$0xff]
    %v80 = vld [vmem:[#allocation2 + $0x180] sm:$0xff]
    %v81 = vld [vmem:[#allocation2 + $0x188] sm:$0xff]
    %v82 = vld [vmem:[#allocation2 + $0x190] sm:$0xff]
    %v83 = vld [vmem:[#allocation2 + $0x198] sm:$0xff]
    %v84 = vld [vmem:[#allocation2 + $0x1a0] sm:$0xff]
    %v85 = vld [vmem:[#allocation2 + $0x1a8] sm:$0xff]
    %v86 = vld [vmem:[#allocation2 + $0x1b0] sm:$0xff]
    %v87 = vld [vmem:[#allocation2 + $0x1b8] sm:$0xff]
    %v88 = vld [vmem:[#allocation2 + $0x1c0] sm:$0xff]
    %v89 = vld [vmem:[#allocation2 + $0x1c8] sm:$0xff]
    %v90 = vld [vmem:[#allocation2 + $0x1d0] sm:$0xff]
    %v91 = vld [vmem:[#allocation2 + $0x1d8] sm:$0xff]
    %v92 = vld [vmem:[#allocation2 + $0x1e0] sm:$0xff]
    %v93 = vld [vmem:[#allocation2 + $0x1e8] sm:$0xff]
    %v94 = vld [vmem:[#allocation2 + $0x1f0] sm:$0xff]
    %v95 = vld [vmem:[#allocation2 + $0x1f8] sm:$0xff]
    %v96 = vld [vmem:[#allocation2 + $0x200] sm:$0xff]
    %v97 = vld [vmem:[#allocation2 + $0x208] sm:$0xff]
    %v98 = vld [vmem:[#allocation2 + $0x210] sm:$0xff]
    %v99 = vld [vmem:[#allocation2 + $0x218] sm:$0xff]
    %v100 = vld [vmem:[#allocation2 + $0x220] sm:$0xff]
    %v101 = vld [vmem:[#allocation2 + $0x228] sm:$0xff]
    %v102 = vld [vmem:[#allocation2 + $0x230] sm:$0xff]
    %v103 = vld [vmem:[#allocation2 + $0x238] sm:$0xff]
    %v104 = vld [vmem:[#allocation2 + $0x240] sm:$0x1]
    %v105 = vld [vmem:[#allocation2 + $0x248] sm:$0x1]
    %v106 = vld [vmem:[#allocation2 + $0x250] sm:$0x1]
    %v107 = vld [vmem:[#allocation2 + $0x258] sm:$0x1]
    %v108 = vld [vmem:[#allocation2 + $0x260] sm:$0x1]
    %v109 = vld [vmem:[#allocation2 + $0x268] sm:$0x1]
    %v110 = vld [vmem:[#allocation2 + $0x270] sm:$0x1]
    %v111 = vld [vmem:[#allocation2 + $0x278] sm:$0x1]
    %v112 = vld [vmem:[#allocation2 + $0x280] sm:$0x1]
    %v113 = vld [vmem:[#allocation2 + $0x288] sm:$0x1]
    %v114 = vld [vmem:[#allocation2 + $0x290] sm:$0x1]
    %v115 = vld [vmem:[#allocation2 + $0x298] sm:$0x1]
    %v116 = vadd.f32 %v32, %v44
    %v117 = vadd.f32 %v116, %v56
    %v118 = vadd.f32 %v117, %v68
    %v119 = vadd.f32 %v118, %v80
    %v120 = vadd.f32 %v119, %v92
    %vm121 = vcmask 1040384
    %v122 = vsel %vm121, %v104, 0.0
    %v123 = vadd.f32 %v120, %v122
    %v124 = vrot.slane %v123, 4
    %v125 = vadd.f32 %v123, %v124
    %v126 = vrot.slane %v125, 2
    %v127 = vadd.f32 %v125, %v126
    %v128 = vrot.slane %v127, 1
    %v129 = vadd.f32 %v127, %v128
    %v130 = vadd.f32 %v33, %v45
    %v131 = vadd.f32 %v130, %v57
    %v132 = vadd.f32 %v131, %v69
    %v133 = vadd.f32 %v132, %v81
    %v134 = vadd.f32 %v133, %v93
    %v135 = vsel %vm121, %v105, 0.0
    %v136 = vadd.f32 %v134, %v135
    %v137 = vrot.slane %v136, 4
    %v138 = vadd.f32 %v136, %v137
    %v139 = vrot.slane %v138, 2
    %v140 = vadd.f32 %v138, %v139
    %v141 = vrot.slane %v140, 1
    %v142 = vadd.f32 %v140, %v141
    %v143 = vadd.f32 %v34, %v46
    %v144 = vadd.f32 %v143, %v58
    %v145 = vadd.f32 %v144, %v70
    %v146 = vadd.f32 %v145, %v82
    %v147 = vadd.f32 %v146, %v94
    %v148 = vsel %vm121, %v106, 0.0
    %v149 = vadd.f32 %v147, %v148
    %v150 = vrot.slane %v149, 4
    %v151 = vadd.f32 %v149, %v150
    %v152 = vrot.slane %v151, 2
    %v153 = vadd.f32 %v151, %v152
    %v154 = vrot.slane %v153, 1
    %v155 = vadd.f32 %v153, %v154
    %v156 = vadd.f32 %v35, %v47
    %v157 = vadd.f32 %v156, %v59
    %v158 = vadd.f32 %v157, %v71
    %v159 = vadd.f32 %v158, %v83
    %v160 = vadd.f32 %v159, %v95
    %v161 = vsel %vm121, %v107, 0.0
    %v162 = vadd.f32 %v160, %v161
    %v163 = vrot.slane %v162, 4
    %v164 = vadd.f32 %v162, %v163
    %v165 = vrot.slane %v164, 2
    %v166 = vadd.f32 %v164, %v165
    %v167 = vrot.slane %v166, 1
    %v168 = vadd.f32 %v166, %v167
    %v169 = vadd.f32 %v36, %v48
    %v170 = vadd.f32 %v169, %v60
    %v171 = vadd.f32 %v170, %v72
    %v172 = vadd.f32 %v171, %v84
    %v173 = vadd.f32 %v172, %v96
    %v174 = vsel %vm121, %v108, 0.0
    %v175 = vadd.f32 %v173, %v174
    %v176 = vrot.slane %v175, 4
    %v177 = vadd.f32 %v175, %v176
    %v178 = vrot.slane %v177, 2
    %v179 = vadd.f32 %v177, %v178
    %v180 = vrot.slane %v179, 1
    %v181 = vadd.f32 %v179, %v180
    %v182 = vadd.f32 %v37, %v49
    %v183 = vadd.f32 %v182, %v61
    %v184 = vadd.f32 %v183, %v73
    %v185 = vadd.f32 %v184, %v85
    %v186 = vadd.f32 %v185, %v97
    %v187 = vsel %vm121, %v109, 0.0
    %v188 = vadd.f32 %v186, %v187
    %v189 = vrot.slane %v188, 4
    %v190 = vadd.f32 %v188, %v189
    %v191 = vrot.slane %v190, 2
    %v192 = vadd.f32 %v190, %v191
    %v193 = vrot.slane %v192, 1
    %v194 = vadd.f32 %v192, %v193
    %v195 = vadd.f32 %v38, %v50
    %v196 = vadd.f32 %v195, %v62
    %v197 = vadd.f32 %v196, %v74
    %v198 = vadd.f32 %v197, %v86
    %v199 = vadd.f32 %v198, %v98
    %v200 = vsel %vm121, %v110, 0.0
    %v201 = vadd.f32 %v199, %v200
    %v202 = vrot.slane %v201, 4
    %v203 = vadd.f32 %v201, %v202
    %v204 = vrot.slane %v203, 2
    %v205 = vadd.f32 %v203, %v204
    %v206 = vrot.slane %v205, 1
    %v207 = vadd.f32 %v205, %v206
    %v208 = vadd.f32 %v39, %v51
    %v209 = vadd.f32 %v208, %v63
    %v210 = vadd.f32 %v209, %v75
    %v211 = vadd.f32 %v210, %v87
    %v212 = vadd.f32 %v211, %v99
    %v213 = vsel %vm121, %v111, 0.0
    %v214 = vadd.f32 %v212, %v213
    %v215 = vrot.slane %v214, 4
    %v216 = vadd.f32 %v214, %v215
    %v217 = vrot.slane %v216, 2
    %v218 = vadd.f32 %v216, %v217
    %v219 = vrot.slane %v218, 1
    %v220 = vadd.f32 %v218, %v219
    %v221 = vadd.f32 %v40, %v52
    %v222 = vadd.f32 %v221, %v64
    %v223 = vadd.f32 %v222, %v76
    %v224 = vadd.f32 %v223, %v88
    %v225 = vadd.f32 %v224, %v100
    %v226 = vsel %vm121, %v112, 0.0
    %v227 = vadd.f32 %v225, %v226
    %v228 = vrot.slane %v227, 4
    %v229 = vadd.f32 %v227, %v228
    %v230 = vrot.slane %v229, 2
    %v231 = vadd.f32 %v229, %v230
    %v232 = vrot.slane %v231, 1
    %v233 = vadd.f32 %v231, %v232
    %v234 = vadd.f32 %v41, %v53
    %v235 = vadd.f32 %v234, %v65
    %v236 = vadd.f32 %v235, %v77
    %v237 = vadd.f32 %v236, %v89
    %v238 = vadd.f32 %v237, %v101
    %v239 = vsel %vm121, %v113, 0.0
    %v240 = vadd.f32 %v238, %v239
    %v241 = vrot.slane %v240, 4
    %v242 = vadd.f32 %v240, %v241
    %v243 = vrot.slane %v242, 2
    %v244 = vadd.f32 %v242, %v243
    %v245 = vrot.slane %v244, 1
    %v246 = vadd.f32 %v244, %v245
    %v247 = vadd.f32 %v42, %v54
    %v248 = vadd.f32 %v247, %v66
    %v249 = vadd.f32 %v248, %v78
    %v250 = vadd.f32 %v249, %v90
    %v251 = vadd.f32 %v250, %v102
    %v252 = vsel %vm121, %v114, 0.0
    %v253 = vadd.f32 %v251, %v252
    %v254 = vrot.slane %v253, 4
    %v255 = vadd.f32 %v253, %v254
    %v256 = vrot.slane %v255, 2
    %v257 = vadd.f32 %v255, %v256
    %v258 = vrot.slane %v257, 1
    %v259 = vadd.f32 %v257, %v258
    %vm260 = vcmask 654336
    %v261 = vsel %vm260, %v43, 0.0
    %v262 = vsel %vm260, %v55, 0.0
    %v263 = vadd.f32 %v261, %v262
    %v264 = vsel %vm260, %v67, 0.0
    %v265 = vadd.f32 %v263, %v264
    %v266 = vsel %vm260, %v79, 0.0
    %v267 = vadd.f32 %v265, %v266
    %v268 = vsel %vm260, %v91, 0.0
    %v269 = vadd.f32 %v267, %v268
    %v270 = vsel %vm260, %v103, 0.0
    %v271 = vadd.f32 %v269, %v270
    %vm272 = vcmask 647168
    %v273 = vsel %vm272, %v115, 0.0
    %v274 = vadd.f32 %v271, %v273
    %v275 = vrot.slane %v274, 4
    %v276 = vadd.f32 %v274, %v275
    %v277 = vrot.slane %v276, 2
    %v278 = vadd.f32 %v276, %v277
    %v279 = vrot.slane %v278, 1
    %v280 = vadd.f32 %v278, %v279
    %v281 = vmul.f32 %v129, 0.020408163
    %v282 = vmul.f32 %v142, 0.020408163
    %v283 = vmul.f32 %v155, 0.020408163
    %v284 = vmul.f32 %v168, 0.020408163
    %v285 = vmul.f32 %v181, 0.020408163
    %v286 = vmul.f32 %v194, 0.020408163
    %v287 = vmul.f32 %v207, 0.020408163
    %v288 = vmul.f32 %v220, 0.020408163
    %v289 = vmul.f32 %v233, 0.020408163
    %v290 = vmul.f32 %v246, 0.020408163
    %v291 = vmul.f32 %v259, 0.020408163
    %v292 = vmul.f32 %v280, 0.020408163
    %v293 = vsub.f32 %v32, %v281
    %v294 = vsub.f32 %v33, %v282
    %v295 = vsub.f32 %v34, %v283
    %v296 = vsub.f32 %v35, %v284
    %v297 = vsub.f32 %v36, %v285
    %v298 = vsub.f32 %v37, %v286
    %v299 = vsub.f32 %v38, %v287
    %v300 = vsub.f32 %v39, %v288
    %v301 = vsub.f32 %v40, %v289
    %v302 = vsub.f32 %v41, %v290
    %v303 = vsub.f32 %v42, %v291
    %v304 = vsub.f32 %v43, %v292
    %v305 = vsub.f32 %v44, %v281
    %v306 = vsub.f32 %v45, %v282
    %v307 = vsub.f32 %v46, %v283
    %v308 = vsub.f32 %v47, %v284
    %v309 = vsub.f32 %v48, %v285
    %v310 = vsub.f32 %v49, %v286
    %v311 = vsub.f32 %v50, %v287
    %v312 = vsub.f32 %v51, %v288
    %v313 = vsub.f32 %v52, %v289
    %v314 = vsub.f32 %v53, %v290
    %v315 = vsub.f32 %v54, %v291
    %v316 = vsub.f32 %v55, %v292
    %v317 = vsub.f32 %v56, %v281
    %v318 = vsub.f32 %v57, %v282
    %v319 = vsub.f32 %v58, %v283
    %v320 = vsub.f32 %v59, %v284
    %v321 = vsub.f32 %v60, %v285
    %v322 = vsub.f32 %v61, %v286
    %v323 = vsub.f32 %v62, %v287
    %v324 = vsub.f32 %v63, %v288
    %v325 = vsub.f32 %v64, %v289
    %v326 = vsub.f32 %v65, %v290
    %v327 = vsub.f32 %v66, %v291
    %v328 = vsub.f32 %v67, %v292
    %v329 = vsub.f32 %v68, %v281
    %v330 = vsub.f32 %v69, %v282
    %v331 = vsub.f32 %v70, %v283
    %v332 = vsub.f32 %v71, %v284
    %v333 = vsub.f32 %v72, %v285
    %v334 = vsub.f32 %v73, %v286
    %v335 = vsub.f32 %v74, %v287
    %v336 = vsub.f32 %v75, %v288
    %v337 = vsub.f32 %v76, %v289
    %v338 = vsub.f32 %v77, %v290
    %v339 = vsub.f32 %v78, %v291
    %v340 = vsub.f32 %v79, %v292
    %v341 = vsub.f32 %v80, %v281
    %v342 = vsub.f32 %v81, %v282
    %v343 = vsub.f32 %v82, %v283
    %v344 = vsub.f32 %v83, %v284
    %v345 = vsub.f32 %v84, %v285
    %v346 = vsub.f32 %v85, %v286
    %v347 = vsub.f32 %v86, %v287
    %v348 = vsub.f32 %v87, %v288
    %v349 = vsub.f32 %v88, %v289
    %v350 = vsub.f32 %v89, %v290
    %v351 = vsub.f32 %v90, %v291
    %v352 = vsub.f32 %v91, %v292
    %v353 = vsub.f32 %v92, %v281
    %v354 = vsub.f32 %v93, %v282
    %v355 = vsub.f32 %v94, %v283
    %v356 = vsub.f32 %v95, %v284
    %v357 = vsub.f32 %v96, %v285
    %v358 = vsub.f32 %v97, %v286
    %v359 = vsub.f32 %v98, %v287
    %v360 = vsub.f32 %v99, %v288
    %v361 = vsub.f32 %v100, %v289
    %v362 = vsub.f32 %v101, %v290
    %v363 = vsub.f32 %v102, %v291
    %v364 = vsub.f32 %v103, %v292
    %v365 = vsub.f32 %v104, %v281
    %v366 = vsub.f32 %v105, %v282
    %v367 = vsub.f32 %v106, %v283
    %v368 = vsub.f32 %v107, %v284
    %v369 = vsub.f32 %v108, %v285
    %v370 = vsub.f32 %v109, %v286
    %v371 = vsub.f32 %v110, %v287
    %v372 = vsub.f32 %v111, %v288
    %v373 = vsub.f32 %v112, %v289
    %v374 = vsub.f32 %v113, %v290
    %v375 = vsub.f32 %v114, %v291
    %v376 = vsub.f32 %v115, %v292
    %v377 = vmul.f32 %v293, %v293
    %v378 = vmul.f32 %v294, %v294
    %v379 = vmul.f32 %v295, %v295
    %v380 = vmul.f32 %v296, %v296
    %v381 = vmul.f32 %v297, %v297
    %v382 = vmul.f32 %v298, %v298
    %v383 = vmul.f32 %v299, %v299
    %v384 = vmul.f32 %v300, %v300
    %v385 = vmul.f32 %v301, %v301
    %v386 = vmul.f32 %v302, %v302
    %v387 = vmul.f32 %v303, %v303
    %v388 = vmul.f32 %v304, %v304
    %v389 = vmul.f32 %v305, %v305
    %v390 = vmul.f32 %v306, %v306
    %v391 = vmul.f32 %v307, %v307
    %v392 = vmul.f32 %v308, %v308
    %v393 = vmul.f32 %v309, %v309
    %v394 = vmul.f32 %v310, %v310
    %v395 = vmul.f32 %v311, %v311
    %v396 = vmul.f32 %v312, %v312
    %v397 = vmul.f32 %v313, %v313
    %v398 = vmul.f32 %v314, %v314
    %v399 = vmul.f32 %v315, %v315
    %v400 = vmul.f32 %v316, %v316
    %v401 = vmul.f32 %v317, %v317
    %v402 = vmul.f32 %v318, %v318
    %v403 = vmul.f32 %v319, %v319
    %v404 = vmul.f32 %v320, %v320
    %v405 = vmul.f32 %v321, %v321
    %v406 = vmul.f32 %v322, %v322
    %v407 = vmul.f32 %v323, %v323
    %v408 = vmul.f32 %v324, %v324
    %v409 = vmul.f32 %v325, %v325
    %v410 = vmul.f32 %v326, %v326
    %v411 = vmul.f32 %v327, %v327
    %v412 = vmul.f32 %v328, %v328
    %v413 = vmul.f32 %v329, %v329
    %v414 = vmul.f32 %v330, %v330
    %v415 = vmul.f32 %v331, %v331
    %v416 = vmul.f32 %v332, %v332
    %v417 = vmul.f32 %v333, %v333
    %v418 = vmul.f32 %v334, %v334
    %v419 = vmul.f32 %v335, %v335
    %v420 = vmul.f32 %v336, %v336
    %v421 = vmul.f32 %v337, %v337
    %v422 = vmul.f32 %v338, %v338
    %v423 = vmul.f32 %v339, %v339
    %v424 = vmul.f32 %v340, %v340
    %v425 = vmul.f32 %v341, %v341
    %v426 = vmul.f32 %v342, %v342
    %v427 = vmul.f32 %v343, %v343
    %v428 = vmul.f32 %v344, %v344
    %v429 = vmul.f32 %v345, %v345
    %v430 = vmul.f32 %v346, %v346
    %v431 = vmul.f32 %v347, %v347
    %v432 = vmul.f32 %v348, %v348
    %v433 = vmul.f32 %v349, %v349
    %v434 = vmul.f32 %v350, %v350
    %v435 = vmul.f32 %v351, %v351
    %v436 = vmul.f32 %v352, %v352
    %v437 = vmul.f32 %v353, %v353
    %v438 = vmul.f32 %v354, %v354
    %v439 = vmul.f32 %v355, %v355
    %v440 = vmul.f32 %v356, %v356
    %v441 = vmul.f32 %v357, %v357
    %v442 = vmul.f32 %v358, %v358
    %v443 = vmul.f32 %v359, %v359
    %v444 = vmul.f32 %v360, %v360
    %v445 = vmul.f32 %v361, %v361
    %v446 = vmul.f32 %v362, %v362
    %v447 = vmul.f32 %v363, %v363
    %v448 = vmul.f32 %v364, %v364
    %v449 = vmul.f32 %v365, %v365
    %v450 = vmul.f32 %v366, %v366
    %v451 = vmul.f32 %v367, %v367
    %v452 = vmul.f32 %v368, %v368
    %v453 = vmul.f32 %v369, %v369
    %v454 = vmul.f32 %v370, %v370
    %v455 = vmul.f32 %v371, %v371
    %v456 = vmul.f32 %v372, %v372
    %v457 = vmul.f32 %v373, %v373
    %v458 = vmul.f32 %v374, %v374
    %v459 = vmul.f32 %v375, %v375
    %v460 = vmul.f32 %v376, %v376
    %v461 = vadd.f32 %v377, %v389
    %v462 = vadd.f32 %v461, %v401
    %v463 = vadd.f32 %v462, %v413
    %v464 = vadd.f32 %v463, %v425
    %v465 = vadd.f32 %v464, %v437
    %v466 = vsel %vm121, %v449, 0.0
    %v467 = vadd.f32 %v465, %v466
    %v468 = vrot.slane %v467, 4
    %v469 = vadd.f32 %v467, %v468
    %v470 = vrot.slane %v469, 2
    %v471 = vadd.f32 %v469, %v470
    %v472 = vrot.slane %v471, 1
    %v473 = vadd.f32 %v471, %v472
    %v474 = vadd.f32 %v378, %v390
    %v475 = vadd.f32 %v474, %v402
    %v476 = vadd.f32 %v475, %v414
    %v477 = vadd.f32 %v476, %v426
    %v478 = vadd.f32 %v477, %v438
    %v479 = vsel %vm121, %v450, 0.0
    %v480 = vadd.f32 %v478, %v479
    %v481 = vrot.slane %v480, 4
    %v482 = vadd.f32 %v480, %v481
    %v483 = vrot.slane %v482, 2
    %v484 = vadd.f32 %v482, %v483
    %v485 = vrot.slane %v484, 1
    %v486 = vadd.f32 %v484, %v485
    %v487 = vadd.f32 %v379, %v391
    %v488 = vadd.f32 %v487, %v403
    %v489 = vadd.f32 %v488, %v415
    %v490 = vadd.f32 %v489, %v427
    %v491 = vadd.f32 %v490, %v439
    %v492 = vsel %vm121, %v451, 0.0
    %v493 = vadd.f32 %v491, %v492
    %v494 = vrot.slane %v493, 4
    %v495 = vadd.f32 %v493, %v494
    %v496 = vrot.slane %v495, 2
    %v497 = vadd.f32 %v495, %v496
    %v498 = vrot.slane %v497, 1
    %v499 = vadd.f32 %v497, %v498
    %v500 = vadd.f32 %v380, %v392
    %v501 = vadd.f32 %v500, %v404
    %v502 = vadd.f32 %v501, %v416
    %v503 = vadd.f32 %v502, %v428
    %v504 = vadd.f32 %v503, %v440
    %v505 = vsel %vm121, %v452, 0.0
    %v506 = vadd.f32 %v504, %v505
    %v507 = vrot.slane %v506, 4
    %v508 = vadd.f32 %v506, %v507
    %v509 = vrot.slane %v508, 2
    %v510 = vadd.f32 %v508, %v509
    %v511 = vrot.slane %v510, 1
    %v512 = vadd.f32 %v510, %v511
    %v513 = vadd.f32 %v381, %v393
    %v514 = vadd.f32 %v513, %v405
    %v515 = vadd.f32 %v514, %v417
    %v516 = vadd.f32 %v515, %v429
    %v517 = vadd.f32 %v516, %v441
    %v518 = vsel %vm121, %v453, 0.0
    %v519 = vadd.f32 %v517, %v518
    %v520 = vrot.slane %v519, 4
    %v521 = vadd.f32 %v519, %v520
    %v522 = vrot.slane %v521, 2
    %v523 = vadd.f32 %v521, %v522
    %v524 = vrot.slane %v523, 1
    %v525 = vadd.f32 %v523, %v524
    %v526 = vadd.f32 %v382, %v394
    %v527 = vadd.f32 %v526, %v406
    %v528 = vadd.f32 %v527, %v418
    %v529 = vadd.f32 %v528, %v430
    %v530 = vadd.f32 %v529, %v442
    %v531 = vsel %vm121, %v454, 0.0
    %v532 = vadd.f32 %v530, %v531
    %v533 = vrot.slane %v532, 4
    %v534 = vadd.f32 %v532, %v533
    %v535 = vrot.slane %v534, 2
    %v536 = vadd.f32 %v534, %v535
    %v537 = vrot.slane %v536, 1
    %v538 = vadd.f32 %v536, %v537
    %v539 = vadd.f32 %v383, %v395
    %v540 = vadd.f32 %v539, %v407
    %v541 = vadd.f32 %v540, %v419
    %v542 = vadd.f32 %v541, %v431
    %v543 = vadd.f32 %v542, %v443
    %v544 = vsel %vm121, %v455, 0.0
    %v545 = vadd.f32 %v543, %v544
    %v546 = vrot.slane %v545, 4
    %v547 = vadd.f32 %v545, %v546
    %v548 = vrot.slane %v547, 2
    %v549 = vadd.f32 %v547, %v548
    %v550 = vrot.slane %v549, 1
    %v551 = vadd.f32 %v549, %v550
    %v552 = vadd.f32 %v384, %v396
    %v553 = vadd.f32 %v552, %v408
    %v554 = vadd.f32 %v553, %v420
    %v555 = vadd.f32 %v554, %v432
    %v556 = vadd.f32 %v555, %v444
    %v557 = vsel %vm121, %v456, 0.0
    %v558 = vadd.f32 %v556, %v557
    %v559 = vrot.slane %v558, 4
    %v560 = vadd.f32 %v558, %v559
    %v561 = vrot.slane %v560, 2
    %v562 = vadd.f32 %v560, %v561
    %v563 = vrot.slane %v562, 1
    %v564 = vadd.f32 %v562, %v563
    %v565 = vadd.f32 %v385, %v397
    %v566 = vadd.f32 %v565, %v409
    %v567 = vadd.f32 %v566, %v421
    %v568 = vadd.f32 %v567, %v433
    %v569 = vadd.f32 %v568, %v445
    %v570 = vsel %vm121, %v457, 0.0
    %v571 = vadd.f32 %v569, %v570
    %v572 = vrot.slane %v571, 4
    %v573 = vadd.f32 %v571, %v572
    %v574 = vrot.slane %v573, 2
    %v575 = vadd.f32 %v573, %v574
    %v576 = vrot.slane %v575, 1
    %v577 = vadd.f32 %v575, %v576
    %v578 = vadd.f32 %v386, %v398
    %v579 = vadd.f32 %v578, %v410
    %v580 = vadd.f32 %v579, %v422
    %v581 = vadd.f32 %v580, %v434
    %v582 = vadd.f32 %v581, %v446
    %v583 = vsel %vm121, %v458, 0.0
    %v584 = vadd.f32 %v582, %v583
    %v585 = vrot.slane %v584, 4
    %v586 = vadd.f32 %v584, %v585
    %v587 = vrot.slane %v586, 2
    %v588 = vadd.f32 %v586, %v587
    %v589 = vrot.slane %v588, 1
    %v590 = vadd.f32 %v588, %v589
    %v591 = vadd.f32 %v387, %v399
    %v592 = vadd.f32 %v591, %v411
    %v593 = vadd.f32 %v592, %v423
    %v594 = vadd.f32 %v593, %v435
    %v595 = vadd.f32 %v594, %v447
    %v596 = vsel %vm121, %v459, 0.0
    %v597 = vadd.f32 %v595, %v596
    %v598 = vrot.slane %v597, 4
    %v599 = vadd.f32 %v597, %v598
    %v600 = vrot.slane %v599, 2
    %v601 = vadd.f32 %v599, %v600
    %v602 = vrot.slane %v601, 1
    %v603 = vadd.f32 %v601, %v602
    %v604 = vsel %vm260, %v388, 0.0
    %v605 = vsel %vm260, %v400, 0.0
    %v606 = vadd.f32 %v604, %v605
    %v607 = vsel %vm260, %v412, 0.0
    %v608 = vadd.f32 %v606, %v607
    %v609 = vsel %vm260, %v424, 0.0
    %v610 = vadd.f32 %v608, %v609
    %v611 = vsel %vm260, %v436, 0.0
    %v612 = vadd.f32 %v610, %v611
    %v613 = vsel %vm260, %v448, 0.0
    %v614 = vadd.f32 %v612, %v613
    %v615 = vsel %vm272, %v460, 0.0
    %v616 = vadd.f32 %v614, %v615
    %v617 = vrot.slane %v616, 4
    %v618 = vadd.f32 %v616, %v617
    %v619 = vrot.slane %v618, 2
    %v620 = vadd.f32 %v618, %v619
    %v621 = vrot.slane %v620, 1
    %v622 = vadd.f32 %v620, %v621
    %v623 = vmul.f32 %v473, 0.020408163
    %v624 = vmul.f32 %v486, 0.020408163
    %v625 = vmul.f32 %v499, 0.020408163
    %v626 = vmul.f32 %v512, 0.020408163
    %v627 = vmul.f32 %v525, 0.020408163
    %v628 = vmul.f32 %v538, 0.020408163
    %v629 = vmul.f32 %v551, 0.020408163
    %v630 = vmul.f32 %v564, 0.020408163
    %v631 = vmul.f32 %v577, 0.020408163
    %v632 = vmul.f32 %v590, 0.020408163
    %v633 = vmul.f32 %v603, 0.020408163
    %v634 = vmul.f32 %v622, 0.020408163
    %v635 = vadd.f32 %v623, 1e-05
    %v636 = vadd.f32 %v624, 1e-05
    %v637 = vadd.f32 %v625, 1e-05
    %v638 = vadd.f32 %v626, 1e-05
    %v639 = vadd.f32 %v627, 1e-05
    %v640 = vadd.f32 %v628, 1e-05
    %v641 = vadd.f32 %v629, 1e-05
    %v642 = vadd.f32 %v630, 1e-05
    %v643 = vadd.f32 %v631, 1e-05
    %v644 = vadd.f32 %v632, 1e-05
    %v645 = vadd.f32 %v633, 1e-05
    %v646 = vadd.f32 %v634, 1e-05
    %v647 = vrsqrt.pop %v635
    %v648 = vmul.f32 %v647, %v635
    %v649 = vmul.f32 %v648, %v647
    %v650 = vmul.f32 0.5, %v649
    %v651 = vsub.f32 1.5, %v650
    %v652 = vmul.f32 %v647, %v651
    %vm653 = vweird.f32 %v635
    %vm654 = vweird.f32 %v647
    %vm655 = vmor %vm653, %vm654
    %v656 = vsel %vm655, %v647, %v652
    %v657 = vrsqrt.pop %v636
    %v658 = vmul.f32 %v657, %v636
    %v659 = vmul.f32 %v658, %v657
    %v660 = vmul.f32 0.5, %v659
    %v661 = vsub.f32 1.5, %v660
    %v662 = vmul.f32 %v657, %v661
    %vm663 = vweird.f32 %v636
    %vm664 = vweird.f32 %v657
    %vm665 = vmor %vm663, %vm664
    %v666 = vsel %vm665, %v657, %v662
    %v667 = vrsqrt.pop %v637
    %v668 = vmul.f32 %v667, %v637
    %v669 = vmul.f32 %v668, %v667
    %v670 = vmul.f32 0.5, %v669
    %v671 = vsub.f32 1.5, %v670
    %v672 = vmul.f32 %v667, %v671
    %vm673 = vweird.f32 %v637
    %vm674 = vweird.f32 %v667
    %vm675 = vmor %vm673, %vm674
    %v676 = vsel %vm675, %v667, %v672
    %v677 = vrsqrt.pop %v638
    %v678 = vmul.f32 %v677, %v638
    %v679 = vmul.f32 %v678, %v677
    %v680 = vmul.f32 0.5, %v679
    %v681 = vsub.f32 1.5, %v680
    %v682 = vmul.f32 %v677, %v681
    %vm683 = vweird.f32 %v638
    %vm684 = vweird.f32 %v677
    %vm685 = vmor %vm683, %vm684
    %v686 = vsel %vm685, %v677, %v682
    %v687 = vrsqrt.pop %v639
    %v688 = vmul.f32 %v687, %v639
    %v689 = vmul.f32 %v688, %v687
    %v690 = vmul.f32 0.5, %v689
    %v691 = vsub.f32 1.5, %v690
    %v692 = vmul.f32 %v687, %v691
    %vm693 = vweird.f32 %v639
    %vm694 = vweird.f32 %v687
    %vm695 = vmor %vm693, %vm694
    %v696 = vsel %vm695, %v687, %v692
    %v697 = vrsqrt.pop %v640
    %v698 = vmul.f32 %v697, %v640
    %v699 = vmul.f32 %v698, %v697
    %v700 = vmul.f32 0.5, %v699
    %v701 = vsub.f32 1.5, %v700
    %v702 = vmul.f32 %v697, %v701
    %vm703 = vweird.f32 %v640
    %vm704 = vweird.f32 %v697
    %vm705 = vmor %vm703, %vm704
    %v706 = vsel %vm705, %v697, %v702
    %v707 = vrsqrt.pop %v641
    %v708 = vmul.f32 %v707, %v641
    %v709 = vmul.f32 %v708, %v707
    %v710 = vmul.f32 0.5, %v709
    %v711 = vsub.f32 1.5, %v710
    %v712 = vmul.f32 %v707, %v711
    %vm713 = vweird.f32 %v641
    %vm714 = vweird.f32 %v707
    %vm715 = vmor %vm713, %vm714
    %v716 = vsel %vm715, %v707, %v712
    %v717 = vrsqrt.pop %v642
    %v718 = vmul.f32 %v717, %v642
    %v719 = vmul.f32 %v718, %v717
    %v720 = vmul.f32 0.5, %v719
    %v721 = vsub.f32 1.5, %v720
    %v722 = vmul.f32 %v717, %v721
    %vm723 = vweird.f32 %v642
    %vm724 = vweird.f32 %v717
    %vm725 = vmor %vm723, %vm724
    %v726 = vsel %vm725, %v717, %v722
    %v727 = vrsqrt.pop %v643
    %v728 = vmul.f32 %v727, %v643
    %v729 = vmul.f32 %v728, %v727
    %v730 = vmul.f32 0.5, %v729
    %v731 = vsub.f32 1.5, %v730
    %v732 = vmul.f32 %v727, %v731
    %vm733 = vweird.f32 %v643
    %vm734 = vweird.f32 %v727
    %vm735 = vmor %vm733, %vm734
    %v736 = vsel %vm735, %v727, %v732
    %v737 = vrsqrt.pop %v644
    %v738 = vmul.f32 %v737, %v644
    %v739 = vmul.f32 %v738, %v737
    %v740 = vmul.f32 0.5, %v739
    %v741 = vsub.f32 1.5, %v740
    %v742 = vmul.f32 %v737, %v741
    %vm743 = vweird.f32 %v644
    %vm744 = vweird.f32 %v737
    %vm745 = vmor %vm743, %vm744
    %v746 = vsel %vm745, %v737, %v742
    %v747 = vrsqrt.pop %v645
    %v748 = vmul.f32 %v747, %v645
    %v749 = vmul.f32 %v748, %v747
    %v750 = vmul.f32 0.5, %v749
    %v751 = vsub.f32 1.5, %v750
    %v752 = vmul.f32 %v747, %v751
    %vm753 = vweird.f32 %v645
    %vm754 = vweird.f32 %v747
    %vm755 = vmor %vm753, %vm754
    %v756 = vsel %vm755, %v747, %v752
    %v757 = vrsqrt.pop %v646
    %v758 = vmul.f32 %v757, %v646
    %v759 = vmul.f32 %v758, %v757
    %v760 = vmul.f32 0.5, %v759
    %v761 = vsub.f32 1.5, %v760
    %v762 = vmul.f32 %v757, %v761
    %vm763 = vweird.f32 %v646
    %vm764 = vweird.f32 %v757
    %vm765 = vmor %vm763, %vm764
    %v766 = vsel %vm765, %v757, %v762
    %v767 = vld [vmem:[%s1] ss:$2 sm:$0xff]
    %s768 = scalar_lea.vmem %s1, 16
    %v769 = vld [vmem:[%s768] ss:$2 sm:$0xf]
    %s770 = scalar_lea.vmem %s1, 1
    %v771 = vld [vmem:[%s770] ss:$2 sm:$0xff]
    %s772 = scalar_lea.vmem %s1, 17
    %v773 = vld [vmem:[%s772] ss:$2 sm:$0xf]
    %v786 = vrot.slane %v666, 7
    %v787 = vrot.slane %v676, 6
    %v788 = vrot.slane %v686, 5
    %v789 = vrot.slane %v696, 4
    %v790 = vrot.slane %v706, 3
    %v791 = vrot.slane %v716, 2
    %v792 = vrot.slane %v726, 1
    %v793 = vrot.slane %v746, 7
    %v794 = vrot.slane %v756, 6
    %v795 = vrot.slane %v766, 5
    %v796 = vsel %vm121, %v656, %v786
    %vm797 = vcmask 1042434
    %v798 = vsel %vm797, %v787, %v788
    %vm799 = vcmask 1041408
    %v800 = vsel %vm799, %v796, %v798
    %vm801 = vcmask 1044484
    %v802 = vsel %vm801, %v789, %v790
    %vm803 = vcmask 1046534
    %v804 = vsel %vm803, %v791, %v792
    %vm805 = vcmask 1045508
    %v806 = vsel %vm805, %v802, %v804
    %vm807 = vcmask 1043456
    %v808 = vsel %vm807, %v800, %v806
    %v809 = vsel %vm121, %v736, %v793
    %v810 = vsel %vm797, %v794, %v795
    %v811 = vsel %vm799, %v809, %v810
    %v814 = vmul.f32 %v767, %v808
    %v815 = vmul.f32 %v769, %v811
    %v818 = vperm.slane %v814, 0
    %v819 = vperm.slane %v814, 1
    %v820 = vperm.slane %v814, 2
    %v821 = vperm.slane %v814, 3
    %v822 = vperm.slane %v814, 4
    %v823 = vperm.slane %v814, 5
    %v824 = vperm.slane %v814, 6
    %v825 = vperm.slane %v814, 7
    %v826 = vperm.slane %v815, 0
    %v827 = vperm.slane %v815, 1
    %v828 = vperm.slane %v815, 2
    %v829 = vperm.slane %v815, 3
    %v842 = vmul.f32 %v293, %v818
    %v843 = vmul.f32 %v294, %v819
    %v844 = vmul.f32 %v295, %v820
    %v845 = vmul.f32 %v296, %v821
    %v846 = vmul.f32 %v297, %v822
    %v847 = vmul.f32 %v298, %v823
    %v848 = vmul.f32 %v299, %v824
    %v849 = vmul.f32 %v300, %v825
    %v850 = vmul.f32 %v301, %v826
    %v851 = vmul.f32 %v302, %v827
    %v852 = vmul.f32 %v303, %v828
    %v853 = vmul.f32 %v304, %v829
    %v854 = vmul.f32 %v305, %v818
    %v855 = vmul.f32 %v306, %v819
    %v856 = vmul.f32 %v307, %v820
    %v857 = vmul.f32 %v308, %v821
    %v858 = vmul.f32 %v309, %v822
    %v859 = vmul.f32 %v310, %v823
    %v860 = vmul.f32 %v311, %v824
    %v861 = vmul.f32 %v312, %v825
    %v862 = vmul.f32 %v313, %v826
    %v863 = vmul.f32 %v314, %v827
    %v864 = vmul.f32 %v315, %v828
    %v865 = vmul.f32 %v316, %v829
    %v866 = vmul.f32 %v317, %v818
    %v867 = vmul.f32 %v318, %v819
    %v868 = vmul.f32 %v319, %v820
    %v869 = vmul.f32 %v320, %v821
    %v870 = vmul.f32 %v321, %v822
    %v871 = vmul.f32 %v322, %v823
    %v872 = vmul.f32 %v323, %v824
    %v873 = vmul.f32 %v324, %v825
    %v874 = vmul.f32 %v325, %v826
    %v875 = vmul.f32 %v326, %v827
    %v876 = vmul.f32 %v327, %v828
    %v877 = vmul.f32 %v328, %v829
    %v878 = vmul.f32 %v329, %v818
    %v879 = vmul.f32 %v330, %v819
    %v880 = vmul.f32 %v331, %v820
    %v881 = vmul.f32 %v332, %v821
    %v882 = vmul.f32 %v333, %v822
    %v883 = vmul.f32 %v334, %v823
    %v884 = vmul.f32 %v335, %v824
    %v885 = vmul.f32 %v336, %v825
    %v886 = vmul.f32 %v337, %v826
    %v887 = vmul.f32 %v338, %v827
    %v888 = vmul.f32 %v339, %v828
    %v889 = vmul.f32 %v340, %v829
    %v890 = vmul.f32 %v341, %v818
    %v891 = vmul.f32 %v342, %v819
    %v892 = vmul.f32 %v343, %v820
    %v893 = vmul.f32 %v344, %v821
    %v894 = vmul.f32 %v345, %v822
    %v895 = vmul.f32 %v346, %v823
    %v896 = vmul.f32 %v347, %v824
    %v897 = vmul.f32 %v348, %v825
    %v898 = vmul.f32 %v349, %v826
    %v899 = vmul.f32 %v350, %v827
    %v900 = vmul.f32 %v351, %v828
    %v901 = vmul.f32 %v352, %v829
    %v902 = vmul.f32 %v353, %v818
    %v903 = vmul.f32 %v354, %v819
    %v904 = vmul.f32 %v355, %v820
    %v905 = vmul.f32 %v356, %v821
    %v906 = vmul.f32 %v357, %v822
    %v907 = vmul.f32 %v358, %v823
    %v908 = vmul.f32 %v359, %v824
    %v909 = vmul.f32 %v360, %v825
    %v910 = vmul.f32 %v361, %v826
    %v911 = vmul.f32 %v362, %v827
    %v912 = vmul.f32 %v363, %v828
    %v913 = vmul.f32 %v364, %v829
    %v914 = vmul.f32 %v365, %v818
    %v915 = vmul.f32 %v366, %v819
    %v916 = vmul.f32 %v367, %v820
    %v917 = vmul.f32 %v368, %v821
    %v918 = vmul.f32 %v369, %v822
    %v919 = vmul.f32 %v370, %v823
    %v920 = vmul.f32 %v371, %v824
    %v921 = vmul.f32 %v372, %v825
    %v922 = vmul.f32 %v373, %v826
    %v923 = vmul.f32 %v374, %v827
    %v924 = vmul.f32 %v375, %v828
    %v925 = vmul.f32 %v376, %v829
    %v928 = vperm.slane %v771, 0
    %v929 = vperm.slane %v771, 1
    %v930 = vperm.slane %v771, 2
    %v931 = vperm.slane %v771, 3
    %v932 = vperm.slane %v771, 4
    %v933 = vperm.slane %v771, 5
    %v934 = vperm.slane %v771, 6
    %v935 = vperm.slane %v771, 7
    %v936 = vperm.slane %v773, 0
    %v937 = vperm.slane %v773, 1
    %v938 = vperm.slane %v773, 2
    %v939 = vperm.slane %v773, 3
    %v952 = vadd.f32 %v842, %v928
    %v953 = vadd.f32 %v843, %v929
    %v954 = vadd.f32 %v844, %v930
    %v955 = vadd.f32 %v845, %v931
    %v956 = vadd.f32 %v846, %v932
    %v957 = vadd.f32 %v847, %v933
    %v958 = vadd.f32 %v848, %v934
    %v959 = vadd.f32 %v849, %v935
    %v960 = vadd.f32 %v850, %v936
    %v961 = vadd.f32 %v851, %v937
    %v962 = vadd.f32 %v852, %v938
    %v963 = vadd.f32 %v853, %v939
    %v964 = vadd.f32 %v854, %v928
    %v965 = vadd.f32 %v855, %v929
    %v966 = vadd.f32 %v856, %v930
    %v967 = vadd.f32 %v857, %v931
    %v968 = vadd.f32 %v858, %v932
    %v969 = vadd.f32 %v859, %v933
    %v970 = vadd.f32 %v860, %v934
    %v971 = vadd.f32 %v861, %v935
    %v972 = vadd.f32 %v862, %v936
    %v973 = vadd.f32 %v863, %v937
    %v974 = vadd.f32 %v864, %v938
    %v975 = vadd.f32 %v865, %v939
    %v976 = vadd.f32 %v866, %v928
    %v977 = vadd.f32 %v867, %v929
    %v978 = vadd.f32 %v868, %v930
    %v979 = vadd.f32 %v869, %v931
    %v980 = vadd.f32 %v870, %v932
    %v981 = vadd.f32 %v871, %v933
    %v982 = vadd.f32 %v872, %v934
    %v983 = vadd.f32 %v873, %v935
    %v984 = vadd.f32 %v874, %v936
    %v985 = vadd.f32 %v875, %v937
    %v986 = vadd.f32 %v876, %v938
    %v987 = vadd.f32 %v877, %v939
    %v988 = vadd.f32 %v878, %v928
    %v989 = vadd.f32 %v879, %v929
    %v990 = vadd.f32 %v880, %v930
    %v991 = vadd.f32 %v881, %v931
    %v992 = vadd.f32 %v882, %v932
    %v993 = vadd.f32 %v883, %v933
    %v994 = vadd.f32 %v884, %v934
    %v995 = vadd.f32 %v885, %v935
    %v996 = vadd.f32 %v886, %v936
    %v997 = vadd.f32 %v887, %v937
    %v998 = vadd.f32 %v888, %v938
    %v999 = vadd.f32 %v889, %v939
    %v1000 = vadd.f32 %v890, %v928
    %v1001 = vadd.f32 %v891, %v929
    %v1002 = vadd.f32 %v892, %v930
    %v1003 = vadd.f32 %v893, %v931
    %v1004 = vadd.f32 %v894, %v932
    %v1005 = vadd.f32 %v895, %v933
    %v1006 = vadd.f32 %v896, %v934
    %v1007 = vadd.f32 %v897, %v935
    %v1008 = vadd.f32 %v898, %v936
    %v1009 = vadd.f32 %v899, %v937
    %v1010 = vadd.f32 %v900, %v938
    %v1011 = vadd.f32 %v901, %v939
    %v1012 = vadd.f32 %v902, %v928
    %v1013 = vadd.f32 %v903, %v929
    %v1014 = vadd.f32 %v904, %v930
    %v1015 = vadd.f32 %v905, %v931
    %v1016 = vadd.f32 %v906, %v932
    %v1017 = vadd.f32 %v907, %v933
    %v1018 = vadd.f32 %v908, %v934
    %v1019 = vadd.f32 %v909, %v935
    %v1020 = vadd.f32 %v910, %v936
    %v1021 = vadd.f32 %v911, %v937
    %v1022 = vadd.f32 %v912, %v938
    %v1023 = vadd.f32 %v913, %v939
    %v1024 = vadd.f32 %v914, %v928
    %v1025 = vadd.f32 %v915, %v929
    %v1026 = vadd.f32 %v916, %v930
    %v1027 = vadd.f32 %v917, %v931
    %v1028 = vadd.f32 %v918, %v932
    %v1029 = vadd.f32 %v919, %v933
    %v1030 = vadd.f32 %v920, %v934
    %v1031 = vadd.f32 %v921, %v935
    %v1032 = vadd.f32 %v922, %v936
    %v1033 = vadd.f32 %v923, %v937
    %v1034 = vadd.f32 %v924, %v938
    %v1035 = vadd.f32 %v925, %v939
    %v1036 = vmax.f32 %v952, 0.0
    %v1037 = vmax.f32 %v953, 0.0
    %v1038 = vmax.f32 %v954, 0.0
    %v1039 = vmax.f32 %v955, 0.0
    %v1040 = vmax.f32 %v956, 0.0
    %v1041 = vmax.f32 %v957, 0.0
    %v1042 = vmax.f32 %v958, 0.0
    %v1043 = vmax.f32 %v959, 0.0
    %v1044 = vmax.f32 %v960, 0.0
    %v1045 = vmax.f32 %v961, 0.0
    %v1046 = vmax.f32 %v962, 0.0
    %v1047 = vmax.f32 %v963, 0.0
    %v1048 = vmax.f32 %v964, 0.0
    %v1049 = vmax.f32 %v965, 0.0
    %v1050 = vmax.f32 %v966, 0.0
    %v1051 = vmax.f32 %v967, 0.0
    %v1052 = vmax.f32 %v968, 0.0
    %v1053 = vmax.f32 %v969, 0.0
    %v1054 = vmax.f32 %v970, 0.0
    %v1055 = vmax.f32 %v971, 0.0
    %v1056 = vmax.f32 %v972, 0.0
    %v1057 = vmax.f32 %v973, 0.0
    %v1058 = vmax.f32 %v974, 0.0
    %v1059 = vmax.f32 %v975, 0.0
    %v1060 = vmax.f32 %v976, 0.0
    %v1061 = vmax.f32 %v977, 0.0
    %v1062 = vmax.f32 %v978, 0.0
    %v1063 = vmax.f32 %v979, 0.0
    %v1064 = vmax.f32 %v980, 0.0
    %v1065 = vmax.f32 %v981, 0.0
    %v1066 = vmax.f32 %v982, 0.0
    %v1067 = vmax.f32 %v983, 0.0
    %v1068 = vmax.f32 %v984, 0.0
    %v1069 = vmax.f32 %v985, 0.0
    %v1070 = vmax.f32 %v986, 0.0
    %v1071 = vmax.f32 %v987, 0.0
    %v1072 = vmax.f32 %v988, 0.0
    %v1073 = vmax.f32 %v989, 0.0
    %v1074 = vmax.f32 %v990, 0.0
    %v1075 = vmax.f32 %v991, 0.0
    %v1076 = vmax.f32 %v992, 0.0
    %v1077 = vmax.f32 %v993, 0.0
    %v1078 = vmax.f32 %v994, 0.0
    %v1079 = vmax.f32 %v995, 0.0
    %v1080 = vmax.f32 %v996, 0.0
    %v1081 = vmax.f32 %v997, 0.0
    %v1082 = vmax.f32 %v998, 0.0
    %v1083 = vmax.f32 %v999, 0.0
    %v1084 = vmax.f32 %v1000, 0.0
    %v1085 = vmax.f32 %v1001, 0.0
    %v1086 = vmax.f32 %v1002, 0.0
    %v1087 = vmax.f32 %v1003, 0.0
    %v1088 = vmax.f32 %v1004, 0.0
    %v1089 = vmax.f32 %v1005, 0.0
    %v1090 = vmax.f32 %v1006, 0.0
    %v1091 = vmax.f32 %v1007, 0.0
    %v1092 = vmax.f32 %v1008, 0.0
    %v1093 = vmax.f32 %v1009, 0.0
    %v1094 = vmax.f32 %v1010, 0.0
    %v1095 = vmax.f32 %v1011, 0.0
    %v1096 = vmax.f32 %v1012, 0.0
    %v1097 = vmax.f32 %v1013, 0.0
    %v1098 = vmax.f32 %v1014, 0.0
    %v1099 = vmax.f32 %v1015, 0.0
    %v1100 = vmax.f32 %v1016, 0.0
    %v1101 = vmax.f32 %v1017, 0.0
    %v1102 = vmax.f32 %v1018, 0.0
    %v1103 = vmax.f32 %v1019, 0.0
    %v1104 = vmax.f32 %v1020, 0.0
    %v1105 = vmax.f32 %v1021, 0.0
    %v1106 = vmax.f32 %v1022, 0.0
    %v1107 = vmax.f32 %v1023, 0.0
    %v1108 = vmax.f32 %v1024, 0.0
    %v1109 = vmax.f32 %v1025, 0.0
    %v1110 = vmax.f32 %v1026, 0.0
    %v1111 = vmax.f32 %v1027, 0.0
    %v1112 = vmax.f32 %v1028, 0.0
    %v1113 = vmax.f32 %v1029, 0.0
    %v1114 = vmax.f32 %v1030, 0.0
    %v1115 = vmax.f32 %v1031, 0.0
    %v1116 = vmax.f32 %v1032, 0.0
    %v1117 = vmax.f32 %v1033, 0.0
    %v1118 = vmax.f32 %v1034, 0.0
    %v1119 = vmax.f32 %v1035, 0.0
    %1120 = vst [vmem:[#allocation5] sm:$0xff] %v1036
    %1121 = vst [vmem:[#allocation5 + $0x8] sm:$0xff] %v1037
    %1122 = vst [vmem:[#allocation5 + $0x10] sm:$0xff] %v1038
    %1123 = vst [vmem:[#allocation5 + $0x18] sm:$0xff] %v1039
    %1124 = vst [vmem:[#allocation5 + $0x20] sm:$0xff] %v1040
    %1125 = vst [vmem:[#allocation5 + $0x28] sm:$0xff] %v1041
    %1126 = vst [vmem:[#allocation5 + $0x30] sm:$0xff] %v1042
    %1127 = vst [vmem:[#allocation5 + $0x38] sm:$0xff] %v1043
    %1128 = vst [vmem:[#allocation5 + $0x40] sm:$0xff] %v1044
    %1129 = vst [vmem:[#allocation5 + $0x48] sm:$0xff] %v1045
    %1130 = vst [vmem:[#allocation5 + $0x50] sm:$0xff] %v1046
    %1131 = vst.msk [vmem:[#allocation5 + $0x58] sm:$0xff] %vm260, %v1047
    %1132 = vst [vmem:[#allocation5 + $0x60] sm:$0xff] %v1048
    %1133 = vst [vmem:[#allocation5 + $0x68] sm:$0xff] %v1049
    %1134 = vst [vmem:[#allocation5 + $0x70] sm:$0xff] %v1050
    %1135 = vst [vmem:[#allocation5 + $0x78] sm:$0xff] %v1051
    %1136 = vst [vmem:[#allocation5 + $0x80] sm:$0xff] %v1052
    %1137 = vst [vmem:[#allocation5 + $0x88] sm:$0xff] %v1053
    %1138 = vst [vmem:[#allocation5 + $0x90] sm:$0xff] %v1054
    %1139 = vst [vmem:[#allocation5 + $0x98] sm:$0xff] %v1055
    %1140 = vst [vmem:[#allocation5 + $0xa0] sm:$0xff] %v1056
    %1141 = vst [vmem:[#allocation5 + $0xa8] sm:$0xff] %v1057
    %1142 = vst [vmem:[#allocation5 + $0xb0] sm:$0xff] %v1058
    %1143 = vst.msk [vmem:[#allocation5 + $0xb8] sm:$0xff] %vm260, %v1059
    %1144 = vst [vmem:[#allocation5 + $0xc0] sm:$0xff] %v1060
    %1145 = vst [vmem:[#allocation5 + $0xc8] sm:$0xff] %v1061
    %1146 = vst [vmem:[#allocation5 + $0xd0] sm:$0xff] %v1062
    %1147 = vst [vmem:[#allocation5 + $0xd8] sm:$0xff] %v1063
    %1148 = vst [vmem:[#allocation5 + $0xe0] sm:$0xff] %v1064
    %1149 = vst [vmem:[#allocation5 + $0xe8] sm:$0xff] %v1065
    %1150 = vst [vmem:[#allocation5 + $0xf0] sm:$0xff] %v1066
    %1151 = vst [vmem:[#allocation5 + $0xf8] sm:$0xff] %v1067
    %1152 = vst [vmem:[#allocation5 + $0x100] sm:$0xff] %v1068
    %1153 = vst [vmem:[#allocation5 + $0x108] sm:$0xff] %v1069
    %1154 = vst [vmem:[#allocation5 + $0x110] sm:$0xff] %v1070
    %1155 = vst.msk [vmem:[#allocation5 + $0x118] sm:$0xff] %vm260, %v1071
    %1156 = vst [vmem:[#allocation5 + $0x120] sm:$0xff] %v1072
    %1157 = vst [vmem:[#allocation5 + $0x128] sm:$0xff] %v1073
    %1158 = vst [vmem:[#allocation5 + $0x130] sm:$0xff] %v1074
    %1159 = vst [vmem:[#allocation5 + $0x138] sm:$0xff] %v1075
    %1160 = vst [vmem:[#allocation5 + $0x140] sm:$0xff] %v1076
    %1161 = vst [vmem:[#allocation5 + $0x148] sm:$0xff] %v1077
    %1162 = vst [vmem:[#allocation5 + $0x150] sm:$0xff] %v1078
    %1163 = vst [vmem:[#allocation5 + $0x158] sm:$0xff] %v1079
    %1164 = vst [vmem:[#allocation5 + $0x160] sm:$0xff] %v1080
    %1165 = vst [vmem:[#allocation5 + $0x168] sm:$0xff] %v1081
    %1166 = vst [vmem:[#allocation5 + $0x170] sm:$0xff] %v1082
    %1167 = vst.msk [vmem:[#allocation5 + $0x178] sm:$0xff] %vm260, %v1083
    %1168 = vst [vmem:[#allocation5 + $0x180] sm:$0xff] %v1084
    %1169 = vst [vmem:[#allocation5 + $0x188] sm:$0xff] %v1085
    %1170 = vst [vmem:[#allocation5 + $0x190] sm:$0xff] %v1086
    %1171 = vst [vmem:[#allocation5 + $0x198] sm:$0xff] %v1087
    %1172 = vst [vmem:[#allocation5 + $0x1a0] sm:$0xff] %v1088
    %1173 = vst [vmem:[#allocation5 + $0x1a8] sm:$0xff] %v1089
    %1174 = vst [vmem:[#allocation5 + $0x1b0] sm:$0xff] %v1090
    %1175 = vst [vmem:[#allocation5 + $0x1b8] sm:$0xff] %v1091
    %1176 = vst [vmem:[#allocation5 + $0x1c0] sm:$0xff] %v1092
    %1177 = vst [vmem:[#allocation5 + $0x1c8] sm:$0xff] %v1093
    %1178 = vst [vmem:[#allocation5 + $0x1d0] sm:$0xff] %v1094
    %1179 = vst.msk [vmem:[#allocation5 + $0x1d8] sm:$0xff] %vm260, %v1095
    %1180 = vst [vmem:[#allocation5 + $0x1e0] sm:$0xff] %v1096
    %1181 = vst [vmem:[#allocation5 + $0x1e8] sm:$0xff] %v1097
    %1182 = vst [vmem:[#allocation5 + $0x1f0] sm:$0xff] %v1098
    %1183 = vst [vmem:[#allocation5 + $0x1f8] sm:$0xff] %v1099
    %1184 = vst [vmem:[#allocation5 + $0x200] sm:$0xff] %v1100
    %1185 = vst [vmem:[#allocation5 + $0x208] sm:$0xff] %v1101
    %1186 = vst [vmem:[#allocation5 + $0x210] sm:$0xff] %v1102
    %1187 = vst [vmem:[#allocation5 + $0x218] sm:$0xff] %v1103
    %1188 = vst [vmem:[#allocation5 + $0x220] sm:$0xff] %v1104
    %1189 = vst [vmem:[#allocation5 + $0x228] sm:$0xff] %v1105
    %1190 = vst [vmem:[#allocation5 + $0x230] sm:$0xff] %v1106
    %1191 = vst.msk [vmem:[#allocation5 + $0x238] sm:$0xff] %vm260, %v1107
    %1192 = vst [vmem:[#allocation5 + $0x240] sm:$0x1] %v1108
    %1193 = vst [vmem:[#allocation5 + $0x248] sm:$0x1] %v1109
    %1194 = vst [vmem:[#allocation5 + $0x250] sm:$0x1] %v1110
    %1195 = vst [vmem:[#allocation5 + $0x258] sm:$0x1] %v1111
    %1196 = vst [vmem:[#allocation5 + $0x260] sm:$0x1] %v1112
    %1197 = vst [vmem:[#allocation5 + $0x268] sm:$0x1] %v1113
    %1198 = vst [vmem:[#allocation5 + $0x270] sm:$0x1] %v1114
    %1199 = vst [vmem:[#allocation5 + $0x278] sm:$0x1] %v1115
    %1200 = vst [vmem:[#allocation5 + $0x280] sm:$0x1] %v1116
    %1201 = vst [vmem:[#allocation5 + $0x288] sm:$0x1] %v1117
    %1202 = vst [vmem:[#allocation5 + $0x290] sm:$0x1] %v1118
    %1203 = vst.msk [vmem:[#allocation5 + $0x298] sm:$0x1] %vm272, %v1119
    %v1216 = vrot.slane %v282, 7
    %v1217 = vrot.slane %v283, 6
    %v1218 = vrot.slane %v284, 5
    %v1219 = vrot.slane %v285, 4
    %v1220 = vrot.slane %v286, 3
    %v1221 = vrot.slane %v287, 2
    %v1222 = vrot.slane %v288, 1
    %v1223 = vrot.slane %v290, 7
    %v1224 = vrot.slane %v291, 6
    %v1225 = vrot.slane %v292, 5
    %v1226 = vsel %vm121, %v281, %v1216
    %v1227 = vsel %vm797, %v1217, %v1218
    %v1228 = vsel %vm799, %v1226, %v1227
    %v1229 = vsel %vm801, %v1219, %v1220
    %v1230 = vsel %vm803, %v1221, %v1222
    %v1231 = vsel %vm805, %v1229, %v1230
    %v1232 = vsel %vm807, %v1228, %v1231
    %v1233 = vsel %vm121, %v289, %v1223
    %v1234 = vsel %vm797, %v1224, %v1225
    %v1235 = vsel %vm799, %v1233, %v1234
    %1238 = vst [vmem:[#allocation6] sm:$0xff] %v1232
    %v1239 = vlaneseq
    %vm1240 = vcmp.ge.s32.totalorder %v1239, 0
    %vm1241 = vcmp.lt.s32.totalorder %v1239, 464
    %vm1242 = vmand %vm1240, %vm1241
    %1243 = vst.msk [vmem:[#allocation6 + $0x8] sm:$0xf] %vm1242, %v1235
    %v1256 = vrot.slane %v624, 7
    %v1257 = vrot.slane %v625, 6
    %v1258 = vrot.slane %v626, 5
    %v1259 = vrot.slane %v627, 4
    %v1260 = vrot.slane %v628, 3
    %v1261 = vrot.slane %v629, 2
    %v1262 = vrot.slane %v630, 1
    %v1263 = vrot.slane %v632, 7
    %v1264 = vrot.slane %v633, 6
    %v1265 = vrot.slane %v634, 5
    %v1266 = vsel %vm121, %v623, %v1256
    %v1267 = vsel %vm797, %v1257, %v1258
    %v1268 = vsel %vm799, %v1266, %v1267
    %v1269 = vsel %vm801, %v1259, %v1260
    %v1270 = vsel %vm803, %v1261, %v1262
    %v1271 = vsel %vm805, %v1269, %v1270
    %v1272 = vsel %vm807, %v1268, %v1271
    %v1273 = vsel %vm121, %v631, %v1263
    %v1274 = vsel %vm797, %v1264, %v1265
    %v1275 = vsel %vm799, %v1273, %v1274
    %1278 = vst [vmem:[#allocation8] sm:$0xff] %v1272
    %1279 = vst.msk [vmem:[#allocation8 + $0x8] sm:$0xf] %vm1242, %v1275
    // Predicated region
    $region14: #{tpu_custom_call.1} parent=1 // pred_check
      _
    $region15: #{tpu_custom_call.1} parent=1 // pred_check_branch
      %1281 = sbr.rel (0) target = $region17
    $region16: #{tpu_custom_call.1} parent=1 // pred_region
      %1283 = vsyncadd [#allocation4], 0
      %s1284 = sshll.u32 [#allocation5], 4
      %s1285 = int_to_ptr.vmem [resolvable:$true] %s1284
      %s1286 = sshll.u32 %s2, 4
      %s1287 = int_to_ptr.hbm [resolvable:$true] %s1286
      %1292 = dma.vmem_to_hbm [thread:$0]  %s1285, 10752, %s1287, [#allocation4], 1536, 1536, 96
    $region17: #{tpu_custom_call.1} parent=1 // pred_fallthru
      _
    // Predicated region
    $region18: #{tpu_custom_call.1} parent=1 // pred_check
      _
    $region19: #{tpu_custom_call.1} parent=1 // pred_check_branch
      %1294 = sbr.rel (0) target = $region21
    $region20: #{tpu_custom_call.1} parent=1 // pred_region
      %1296 = vsyncadd [#allocation7], 0
      %s1298 = sshll.u32 [#allocation6], 4
      %s1299 = int_to_ptr.vmem [resolvable:$true] %s1298
      %s1300 = sshll.u32 %s3, 4
      %s1301 = int_to_ptr.hbm [resolvable:$true] %s1300
      %1303 = dma.vmem_to_hbm [thread:$0]  %s1299, 192, %s1301, [#allocation7]
    $region21: #{tpu_custom_call.1} parent=1 // pred_fallthru
      _
    // Predicated region
    $region22: #{tpu_custom_call.1} parent=1 // pred_check
      _
    $region23: #{tpu_custom_call.1} parent=1 // pred_check_branch
      %1305 = sbr.rel (0) target = $region25
    $region24: #{tpu_custom_call.1} parent=1 // pred_region
      %1307 = vsyncadd [#allocation7], 0
      %s1309 = sshll.u32 [#allocation8], 4
      %s1310 = int_to_ptr.vmem [resolvable:$true] %s1309
      %s1311 = sshll.u32 %s4, 4
      %s1312 = int_to_ptr.hbm [resolvable:$true] %s1311
      %1314 = dma.vmem_to_hbm [thread:$0]  %s1310, 192, %s1312, [#allocation7]
    $region25: #{tpu_custom_call.1} parent=1 // pred_fallthru
      _
    // Predicated region
    $region26: #{tpu_custom_call.1} parent=1 // pred_check
      _
    $region27: #{tpu_custom_call.1} parent=1 // pred_check_branch
      %1316 = sbr.rel (0) target = $region29
    $region28: #{tpu_custom_call.1} parent=1 // pred_region
      %1318 = dma.done [#allocation4], 10752
    $region29: #{tpu_custom_call.1} parent=1 // pred_fallthru
      _
    // Predicated region
    $region30: #{tpu_custom_call.1} parent=1 // pred_check
      _
    $region31: #{tpu_custom_call.1} parent=1 // pred_check_branch
      %1320 = sbr.rel (0) target = $region33
    $region32: #{tpu_custom_call.1} parent=1 // pred_region
      %1322 = dma.done [#allocation7], 192
    $region33: #{tpu_custom_call.1} parent=1 // pred_fallthru
      _
    // Predicated region
    $region34: #{tpu_custom_call.1} parent=1 // pred_check
      _
    $region35: #{tpu_custom_call.1} parent=1 // pred_check_branch
      %1324 = sbr.rel (0) target = $region37
    $region36: #{tpu_custom_call.1} parent=1 // pred_region
      %1326 = dma.done [#allocation7], 192
    $region37: #{tpu_custom_call.1} parent=1 // pred_fallthru
      _
    %1327 = vsyncpa [#allocation3], 1
    %1328 = vsyncpa [#allocation4], 1
    %1329 = vsyncpa [#allocation7], 1

</llo_original>
